<compile_context>
chip_gen: v6e
topology: v6e:2x2x1
jax: 0.10.0
libtpu: 0.0.40
codegen_flags: <defaults>
</compile_context>

<pallas_src>
import functools

import jax
import jax.numpy as jnp
from jax.experimental import pallas as pl
from jax.experimental.pallas import tpu as pltpu

LEAKY_SLOPE = 0.2
BN_EPS = 1e-5

MXU_DTYPE = jnp.bfloat16        # MXU operand / intermediate activation storage dtype
TM_MAX = 512                    # max rows per M tile
TK_MAX = 1024                   # max K-reduction tile
VMEM_LIMIT = 48 * 1024 * 1024   # under v7x's 64 MiB physical VMEM, above v5e/v6e defaults


def _round_up(x, m):
    return (x + m - 1) // m * m


def _pick_tk(k_dim):
    """Largest K tile <= TK_MAX that divides K (channel dims are 128-padded)."""
    if k_dim <= TK_MAX:
        return k_dim
    for cand in range(TK_MAX - TK_MAX % 128, 0, -128):
        if k_dim % cand == 0:
            return cand
    return k_dim


# ------------------------------ Pallas kernels -------------------------------

def _fused_matmul_kernel(*refs, has_prologue, has_residual, emit_stats,
                         valid_rows, tm):
    """o = [leaky(x*in_scale+in_shift)] @ w + b [+ residual]; optional per-tile stats."""
    it = iter(refs)
    x_ref = next(it)
    w_ref = next(it)
    b_ref = next(it)
    insc_ref = next(it) if has_prologue else None
    insh_ref = next(it) if has_prologue else None
    res_ref = next(it) if has_residual else None
    o_ref = next(it)
    stats_ref = next(it) if emit_stats else None
    acc_ref = next(it)

    # NOTE: all pl.program_id / pl.num_programs binds happen at the top level of
    # the kernel (never inside a pl.when body) so that both the Mosaic and the
    # interpret-mode lowerings handle them.
    m_idx = pl.program_id(0)
    k = pl.program_id(1)
    n_k = pl.num_programs(1)
    row_start = m_idx * tm

    @pl.when(k == 0)
    def _init():
        acc_ref[...] = jnp.zeros_like(acc_ref)

    x = x_ref[...]
    if has_prologue:
        # Previous stage's BN + LeakyReLU fused as an affine prologue (f32 math).
        xf = x.astype(jnp.float32) * insc_ref[...] + insh_ref[...]
        xf = jnp.where(xf >= 0, xf, LEAKY_SLOPE * xf)
        x = xf.astype(w_ref.dtype)
    else:
        x = x.astype(w_ref.dtype)
    acc_ref[...] += jnp.dot(x, w_ref[...], preferred_element_type=jnp.float32)

    @pl.when(k == n_k - 1)
    def _finalize():
        y = acc_ref[...] + b_ref[...].astype(jnp.float32)
        if has_residual:
            y = y + res_ref[...].astype(jnp.float32)
        o_ref[...] = y.astype(o_ref.dtype)
        if emit_stats:
            # Per-tile channel sum / sumsq (rows beyond the true M are masked out).
            row = row_start + jax.lax.broadcasted_iota(jnp.int32, (tm, 1), 0)
            ym = jnp.where(row < valid_rows, y, 0.0)
            ssum = jnp.sum(ym, axis=0, keepdims=True)
            ssq = jnp.sum(ym * ym, axis=0, keepdims=True)
            pad = jnp.zeros((6, ssum.shape[1]), jnp.float32)
            stats_ref[...] = jnp.concatenate([ssum, ssq, pad], axis=0)[None]


def _scale_shift_act_kernel(x_ref, sc_ref, sh_ref, o_ref, *, apply_act):
    y = x_ref[...].astype(jnp.float32) * sc_ref[...] + sh_ref[...]
    if apply_act:
        y = jnp.where(y >= 0, y, LEAKY_SLOPE * y)
    o_ref[...] = y.astype(o_ref.dtype)


# ------------------------------ kernel wrappers -------------------------------

def fused_matmul(x, w, b, *, in_scale=None, in_shift=None, residual=None,
                 emit_stats=False, out_dtype=None):
    """(M,K) @ (K,N) + b with fused prologue BN+act, residual add and BN stats."""
    m, k_dim = x.shape
    kw, n = w.shape
    assert k_dim == kw, (k_dim, kw)
    out_dtype = out_dtype if out_dtype is not None else x.dtype

    tm = TM_MAX if m > TM_MAX else _round_up(m, 16)
    m_pad = _round_up(m, tm)
    n_m = m_pad // tm
    tk = _pick_tk(k_dim)
    n_k = k_dim // tk

    if m_pad != m:
        x = jnp.pad(x, ((0, m_pad - m), (0, 0)))
        if residual is not None:
            residual = jnp.pad(residual, ((0, m_pad - m), (0, 0)))

    has_prologue = in_scale is not None
    has_residual = residual is not None

    inputs = [x, w, b]
    in_specs = [
        pl.BlockSpec((tm, tk), lambda i, kk: (i, kk)),
        pl.BlockSpec((tk, n), lambda i, kk: (kk, 0)),
        pl.BlockSpec((1, n), lambda i, kk: (0, 0)),
    ]
    if has_prologue:
        inputs += [in_scale.astype(jnp.float32), in_shift.astype(jnp.float32)]
        in_specs += [pl.BlockSpec((1, tk), lambda i, kk: (0, kk)),
                     pl.BlockSpec((1, tk), lambda i, kk: (0, kk))]
    if has_residual:
        inputs.append(residual)
        in_specs.append(pl.BlockSpec((tm, n), lambda i, kk: (i, 0)))

    out_shape = [jax.ShapeDtypeStruct((m_pad, n), out_dtype)]
    out_specs = [pl.BlockSpec((tm, n), lambda i, kk: (i, 0))]
    if emit_stats:
        out_shape.append(jax.ShapeDtypeStruct((n_m, 8, n), jnp.float32))
        out_specs.append(pl.BlockSpec((1, 8, n), lambda i, kk: (i, 0, 0)))

    kernel = functools.partial(
        _fused_matmul_kernel,
        has_prologue=has_prologue, has_residual=has_residual,
        emit_stats=emit_stats, valid_rows=m, tm=tm)

    results = pl.pallas_call(
        kernel,
        out_shape=tuple(out_shape),
        grid_spec=pltpu.PrefetchScalarGridSpec(
            num_scalar_prefetch=0,
            grid=(n_m, n_k),
            in_specs=in_specs,
            out_specs=tuple(out_specs),
            scratch_shapes=[pltpu.VMEM((tm, n), jnp.float32)]),
        compiler_params=pltpu.CompilerParams(
            dimension_semantics=("parallel", "arbitrary"),
            vmem_limit_bytes=VMEM_LIMIT),
    )(*inputs)

    out = results[0]
    if m_pad != m:
        out = out[:m]
    if emit_stats:
        return out, results[1]
    return out


def scale_shift_act(x, scale, shift, *, apply_act=True, out_dtype=None):
    """Tiled per-channel affine (+ LeakyReLU) — used only for the final bn_out apply."""
    m, n = x.shape
    out_dtype = out_dtype if out_dtype is not None else x.dtype
    tm = TM_MAX if m > TM_MAX else _round_up(m, 16)
    m_pad = _round_up(m, tm)
    xp = jnp.pad(x, ((0, m_pad - m), (0, 0))) if m_pad != m else x
    out = pl.pallas_call(
        functools.partial(_scale_shift_act_kernel, apply_act=apply_act),
        out_shape=jax.ShapeDtypeStruct((m_pad, n), out_dtype),
        grid_spec=pltpu.PrefetchScalarGridSpec(
            num_scalar_prefetch=0,
            grid=(m_pad // tm,),
            in_specs=[pl.BlockSpec((tm, n), lambda i: (i, 0)),
                      pl.BlockSpec((1, n), lambda i: (0, 0)),
                      pl.BlockSpec((1, n), lambda i: (0, 0))],
            out_specs=pl.BlockSpec((tm, n), lambda i: (i, 0))),
        compiler_params=pltpu.CompilerParams(
            dimension_semantics=("parallel",),
            vmem_limit_bytes=VMEM_LIMIT),
    )(xp, scale.astype(jnp.float32), shift.astype(jnp.float32))
    return out[:m] if m_pad != m else out


# -------------------------------- JAX glue -----------------------------------

def _bn_scale_shift(stats, count, gamma, beta):
    """Fold training-mode BatchNorm (biased var, eps=1e-5) into y*scale + shift."""
    s = jnp.sum(stats[:, 0, :], axis=0)
    sq = jnp.sum(stats[:, 1, :], axis=0)
    mean = s / count
    var = jnp.maximum(sq / count - mean * mean, 0.0)
    inv = jax.lax.rsqrt(var + BN_EPS)
    scale = gamma * inv
    shift = beta - mean * scale
    return scale.reshape(1, -1), shift.reshape(1, -1)


def _im2col(x_nhwc, ksize, stride, pad, pad_val):
    """kxk patch extraction with a per-channel pad value (plain-JAX glue).

    pad_val is chosen so the padded entries map to exactly 0 *after* the fused
    BN + LeakyReLU prologue (PyTorch zero-pads the post-BN/act tensor).
    """
    # TODO(synk): replace this plain-JAX im2col with an in-kernel shifted-window
    # accumulation (extra k*k 'arbitrary' grid axis) to remove the k^2 HBM blowup.
    n, h, w, c = x_nhwc.shape
    hp, wp = h + 2 * pad, w + 2 * pad
    base = jnp.broadcast_to(pad_val.reshape(1, 1, 1, c), (n, hp, wp, c))
    xp = jax.lax.dynamic_update_slice(base.astype(x_nhwc.dtype), x_nhwc,
                                      (0, pad, pad, 0))
    ho = (h + 2 * pad - ksize) // stride + 1
    wo = (w + 2 * pad - ksize) // stride + 1
    patches = []
    for i in range(ksize):
        for j in range(ksize):
            patches.append(xp[:, i:i + stride * ho:stride,
                              j:j + stride * wo:stride, :])
    p = jnp.stack(patches, axis=3)                       # (n, ho, wo, k*k, c)
    return p.reshape(n * ho * wo, ksize * ksize * c), ho, wo


class BottleneckPallas:
    """Pallas port of the PyTorch Bottleneck block (training-mode BatchNorm)."""

    def __init__(self, dim_in, dim_mid, dim_out, stride=1, key=None):
        if key is None:
            key = jax.random.PRNGKey(0)
        self.dim_in, self.dim_mid, self.dim_out = dim_in, dim_mid, dim_out
        self.stride = stride
        self.k2 = 4 if stride == 2 else 3
        # lane-dense channel widths
        self.cin_p = _round_up(dim_in, 128)
        self.cmid_p = _round_up(dim_mid, 128)
        self.cout_p = _round_up(dim_out, 128)

        ks = jax.random.split(key, 4)

        def conv_params(k, co, ci, kh, kw, co_p, ci_p):
            # PyTorch (co, ci, kh, kw) -> padded matmul weight (kh*kw*ci_p, co_p), bf16.
            w = 0.1 * jax.random.normal(k, (co, ci, kh, kw), jnp.float32)
            b = 0.01 * jax.random.normal(jax.random.fold_in(k, 1), (co,), jnp.float32)
            wm = jnp.transpose(w, (2, 3, 1, 0))
            wm = jnp.pad(wm, ((0, 0), (0, 0), (0, ci_p - ci), (0, co_p - co)))
            wm = wm.reshape(kh * kw * ci_p, co_p).astype(MXU_DTYPE)
            bm = jnp.pad(b, (0, co_p - co)).reshape(1, -1).astype(jnp.float32)
            return wm, bm

        self.w1, self.b1 = conv_params(ks[0], dim_mid, dim_in, 1, 1,
                                       self.cmid_p, self.cin_p)
        self.w2, self.b2 = conv_params(ks[1], dim_mid, dim_mid, self.k2, self.k2,
                                       self.cmid_p, self.cmid_p)
        self.w3, self.b3 = conv_params(ks[2], dim_out, dim_mid, 1, 1,
                                       self.cout_p, self.cmid_p)
        self.has_shortcut = (dim_in != dim_out or stride != 1)
        if self.has_shortcut:
            self.ws, self.bs = conv_params(ks[3], dim_out, dim_in, 1, 1,
                                           self.cout_p, self.cin_p)

        # BatchNorm affine params (PyTorch default init: weight=1, bias=0);
        # padded channels carry gamma=1 / beta=0, harmless since their data is 0.
        self.g2 = jnp.ones((self.cmid_p,), jnp.float32)
        self.be2 = jnp.zeros((self.cmid_p,), jnp.float32)
        self.g3 = jnp.ones((self.cmid_p,), jnp.float32)
        self.be3 = jnp.zeros((self.cmid_p,), jnp.float32)
        self.go = jnp.ones((self.cout_p,), jnp.float32)
        self.beo = jnp.zeros((self.cout_p,), jnp.float32)

    def __call__(self, x_nchw, is_output_activate=True):
        n, c, h, w = x_nchw.shape
        assert c == self.dim_in

        # NCHW -> lane-dense channels-last bf16.
        x_nhwc = jnp.transpose(x_nchw, (0, 2, 3, 1))
        x_nhwc = jnp.pad(x_nhwc, ((0, 0), (0, 0), (0, 0), (0, self.cin_p - c)))
        x_nhwc = x_nhwc.astype(MXU_DTYPE)
        m1 = n * h * w
        x_flat = x_nhwc.reshape(m1, self.cin_p)

        # conv1 (1x1); bn2 batch statistics fused into the same pass.
        out1, st1 = fused_matmul(x_flat, self.w1, self.b1, emit_stats=True)
        sc2, sh2 = _bn_scale_shift(st1, m1, self.g2, self.be2)

        # conv2 (kxk, stride, pad=1) with bn2 + LeakyReLU fused as the prologue.
        # Spatial padding uses the value the prologue maps to exactly 0.
        pad_val = jnp.where(sc2 == 0, 0.0, -sh2 / sc2).reshape(-1)
        out1_img = out1.reshape(n, h, w, self.cmid_p)
        patches, ho, wo = _im2col(out1_img, self.k2, self.stride, 1, pad_val)
        m2 = n * ho * wo
        kk = self.k2 * self.k2
        out2, st2 = fused_matmul(
            patches, self.w2, self.b2,
            in_scale=jnp.tile(sc2, (1, kk)), in_shift=jnp.tile(sh2, (1, kk)),
            emit_stats=True)
        sc3, sh3 = _bn_scale_shift(st2, m2, self.g3, self.be3)

        # shortcut
        if self.has_shortcut:
            xs = x_nhwc[:, ::self.stride, ::self.stride, :][:, :ho, :wo, :]
            residual = fused_matmul(xs.reshape(m2, self.cin_p), self.ws, self.bs)
        else:
            residual = x_flat            # dim_in == dim_out and stride == 1

        # conv3 (1x1) with bn3 + LeakyReLU prologue, residual add in the epilogue,
        # and (when activated) bn_out statistics of (out + residual) in the same pass.
        if is_output_activate:
            out3, st3 = fused_matmul(out2, self.w3, self.b3,
                                     in_scale=sc3, in_shift=sh3,
                                     residual=residual, emit_stats=True)
            sco, sho = _bn_scale_shift(st3, m2, self.go, self.beo)
            final = scale_shift_act(out3, sco, sho, apply_act=True,
                                    out_dtype=jnp.float32)
        else:
            final = fused_matmul(out2, self.w3, self.b3,
                                 in_scale=sc3, in_shift=sh3,
                                 residual=residual, out_dtype=jnp.float32)

        final = final[:, :self.dim_out].reshape(n, ho, wo, self.dim_out)
        return jnp.transpose(final, (0, 3, 1, 2)).astype(x_nchw.dtype)


# ---------------------------------- demo --------------------------------------

if __name__ == "__main__":
    key = jax.random.PRNGKey(0)
    k_x, k_p1, k_p2, k_p3 = jax.random.split(key, 4)

    n, c_in, h, w = 2, 4, 8, 8
    dim_mid, dim_out = 8, 16

    x = jax.random.normal(k_x, (n, c_in, h, w), jnp.float32)

    # stride=1, projection shortcut
    block = BottleneckPallas(c_in, dim_mid, dim_out, stride=1, key=k_p1)
    y = jax.block_until_ready(block(x, is_output_activate=True))
    assert y.shape == (n, dim_out, h, w), y.shape
    assert bool(jnp.all(jnp.isfinite(y)))

    # no-final-activation path
    y2 = jax.block_until_ready(block(x, is_output_activate=False))
    assert y2.shape == (n, dim_out, h, w), y2.shape
    assert bool(jnp.all(jnp.isfinite(y2)))

    # stride=2 variant exercises the 4x4 conv, K tiling and the strided shortcut
    block2 = BottleneckPallas(c_in, dim_mid, dim_out, stride=2, key=k_p2)
    y3 = jax.block_until_ready(block2(x, is_output_activate=True))
    assert y3.shape == (n, dim_out, h // 2, w // 2), y3.shape
    assert bool(jnp.all(jnp.isfinite(y3)))

    # identity-shortcut variant (dim_in == dim_out, stride == 1)
    block3 = BottleneckPallas(dim_out, dim_mid, dim_out, stride=1, key=k_p3)
    y4 = jax.block_until_ready(block3(y, is_output_activate=True))
    assert y4.shape == (n, dim_out, h, w), y4.shape
    assert bool(jnp.all(jnp.isfinite(y4)))

    print("KERNEL_OK")
</pallas_src>

<mosaic_0001>
module attributes {stable_mosaic.version = 11 : i64} {
  func.func @_fused_matmul_kernel(%arg0: i32, %arg1: i32, %arg2: memref<128x128xbf16, #tpu.memory_space<vmem>>, %arg3: memref<128x128xbf16, #tpu.memory_space<vmem>>, %arg4: memref<1x128xf32, #tpu.memory_space<vmem>>, %arg5: memref<128x128xbf16, #tpu.memory_space<vmem>>, %arg6: memref<1x8x128xf32, #tpu.memory_space<vmem>>, %arg7: memref<128x128xf32, #tpu.memory_space<vmem>>) attributes {dimension_semantics = [#tpu.dimension_semantics<parallel>, #tpu.dimension_semantics<arbitrary>], iteration_bounds = array<i64: 1, 1>, scalar_prefetch = 0 : i64, scratch_operands = 1 : i64, tpu.core_type = #tpu.core_type<tc>, window_params = [{transform_indices = @transform_0, window_bounds = array<i64: 128, 128>}, {transform_indices = @transform_1, window_bounds = array<i64: 128, 128>}, {pipeline_mode = #tpu.pipeline_mode<synchronous>, transform_indices = @transform_2, window_bounds = array<i64: 1, 128>}, {transform_indices = @transform_3, window_bounds = array<i64: 128, 128>}, {transform_indices = @transform_4, window_bounds = array<i64: 1, 8, 128>}]} {
    %c128_i32 = arith.constant 128 : i32
    %0 = arith.muli %arg0, %c128_i32 : i32
    %c0_i32 = arith.constant 0 : i32
    %1 = arith.cmpi eq, %arg1, %c0_i32 : i32
    %2 = arith.extui %1 : i1 to i32
    %c0_i32_0 = arith.constant 0 : i32
    %3 = arith.cmpi ne, %2, %c0_i32_0 : i32
    scf.if %3 {
      %cst_10 = arith.constant 0.000000e+00 : f32
      %13 = vector.broadcast %cst_10 : f32 to vector<128x128xf32>
      %c0_11 = arith.constant 0 : index
      %c0_12 = arith.constant 0 : index
      %14 = vector.load %arg7[%c0_11, %c0_12] : memref<128x128xf32, #tpu.memory_space<vmem>>, vector<128x128xf32>
      tpu.vector_store %arg7[%c0_11, %c0_12], %13 {strides = array<i32>} : memref<128x128xf32, #tpu.memory_space<vmem>>, vector<128x128xf32>,
    } else {
    }
    %c0 = arith.constant 0 : index
    %c0_1 = arith.constant 0 : index
    %4 = vector.load %arg2[%c0, %c0_1] : memref<128x128xbf16, #tpu.memory_space<vmem>>, vector<128x128xbf16>
    %c0_2 = arith.constant 0 : index
    %c0_3 = arith.constant 0 : index
    %5 = vector.load %arg7[%c0_2, %c0_3] : memref<128x128xf32, #tpu.memory_space<vmem>>, vector<128x128xf32>
    %c0_4 = arith.constant 0 : index
    %c0_5 = arith.constant 0 : index
    %6 = vector.load %arg3[%c0_4, %c0_5] : memref<128x128xbf16, #tpu.memory_space<vmem>>, vector<128x128xbf16>
    %cst = arith.constant dense<0.000000e+00> : vector<128x128xf32>
    %7 = tpu.matmul %4, %6, %cst {dimension_numbers = #tpu.dot_dimension_numbers<[1], [0], [0], [1], [0, 0, 1, 1], [], []>} : vector<128x128xbf16>, vector<128x128xbf16>, vector<128x128xf32> -> vector<128x128xf32>
    %8 = arith.addf %5, %7 : vector<128x128xf32>
    %c0_6 = arith.constant 0 : index
    %c0_7 = arith.constant 0 : index
    %9 = vector.load %arg7[%c0_6, %c0_7] : memref<128x128xf32, #tpu.memory_space<vmem>>, vector<128x128xf32>
    tpu.vector_store %arg7[%c0_6, %c0_7], %8 {strides = array<i32>} : memref<128x128xf32, #tpu.memory_space<vmem>>, vector<128x128xf32>,
    %c0_i32_8 = arith.constant 0 : i32
    %10 = arith.cmpi eq, %arg1, %c0_i32_8 : i32
    %11 = arith.extui %10 : i1 to i32
    %c0_i32_9 = arith.constant 0 : i32
    %12 = arith.cmpi ne, %11, %c0_i32_9 : i32
    scf.if %12 {
      %c0_10 = arith.constant 0 : index
      %c0_11 = arith.constant 0 : index
      %13 = vector.load %arg7[%c0_10, %c0_11] : memref<128x128xf32, #tpu.memory_space<vmem>>, vector<128x128xf32>
      %c0_12 = arith.constant 0 : index
      %c0_13 = arith.constant 0 : index
      %14 = vector.load %arg4[%c0_12, %c0_13] : memref<1x128xf32, #tpu.memory_space<vmem>>, vector<1x128xf32>
      %15 = vector.broadcast %14 : vector<1x128xf32> to vector<128x128xf32>
      %16 = arith.addf %13, %15 : vector<128x128xf32>
      %17 = arith.truncf %16 : vector<128x128xf32> to vector<128x128xbf16>
      %c0_14 = arith.constant 0 : index
      %c0_15 = arith.constant 0 : index
      %18 = vector.load %arg5[%c0_14, %c0_15] : memref<128x128xbf16, #tpu.memory_space<vmem>>, vector<128x128xbf16>
      tpu.vector_store %arg5[%c0_14, %c0_15], %17 {strides = array<i32>} : memref<128x128xbf16, #tpu.memory_space<vmem>>, vector<128x128xbf16>,
      %19 = tpu.iota {dimensions = array<i32: 0>} : vector<128x1xi32>
      %20 = vector.broadcast %0 : i32 to vector<128x1xi32>
      %21 = arith.addi %20, %19 : vector<128x1xi32>
      %c128_i32_16 = arith.constant 128 : i32
      %22 = vector.broadcast %c128_i32_16 : i32 to vector<128x1xi32>
      %23 = arith.cmpi slt, %21, %22 : vector<128x1xi32>
      %cst_17 = arith.constant 0.000000e+00 : f32
      %24 = vector.shape_cast %23 : vector<128x1xi1> to vector<128x1xi1>
      %25 = vector.broadcast %24 : vector<128x1xi1> to vector<128x128xi1>
      %26 = vector.broadcast %cst_17 : f32 to vector<128x128xf32>
      %27 = arith.select %25, %16, %26 : vector<128x128xi1>, vector<128x128xf32>
      %cst_18 = arith.constant dense<0.000000e+00> : vector<128xf32>
      %28 = vector.multi_reduction <add>, %27, %cst_18 [0] : vector<128x128xf32> to vector<128xf32>
      %29 = vector.shape_cast %28 : vector<128xf32> to vector<1x128xf32>
      %30 = arith.mulf %27, %27 : vector<128x128xf32>
      %cst_19 = arith.constant dense<0.000000e+00> : vector<128xf32>
      %31 = vector.multi_reduction <add>, %30, %cst_19 [0] : vector<128x128xf32> to vector<128xf32>
      %32 = vector.shape_cast %31 : vector<128xf32> to vector<1x128xf32>
      %cst_20 = arith.constant 0.000000e+00 : f32
      %33 = vector.broadcast %cst_20 : f32 to vector<6x128xf32>
      %34 = tpu.concatenate %29, %32, %33 in 0 : vector<1x128xf32>, vector<1x128xf32>, vector<6x128xf32> -> vector<8x128xf32>
      %35 = vector.shape_cast %34 : vector<8x128xf32> to vector<1x8x128xf32>
      %c0_21 = arith.constant 0 : index
      %c0_22 = arith.constant 0 : index
      %c0_23 = arith.constant 0 : index
      %36 = vector.load %arg6[%c0_21, %c0_22, %c0_23] : memref<1x8x128xf32, #tpu.memory_space<vmem>>, vector<1x8x128xf32>
      tpu.vector_store %arg6[%c0_21, %c0_22, %c0_23], %35 {strides = array<i32>} : memref<1x8x128xf32, #tpu.memory_space<vmem>>, vector<1x8x128xf32>,
    } else {
    }
    return
  }
  func.func @transform_0(%arg0: i32, %arg1: i32) -> (i32, i32) {
    %c0_i32 = arith.constant 0 : i32
    return %arg0, %arg1 : i32, i32
  }
  func.func @transform_1(%arg0: i32, %arg1: i32) -> (i32, i32) {
    %c0_i32 = arith.constant 0 : i32
    %c0_i32_0 = arith.constant 0 : i32
    return %arg1, %c0_i32 : i32, i32
  }
  func.func @transform_2(%arg0: i32, %arg1: i32) -> (i32, i32) {
    %c0_i32 = arith.constant 0 : i32
    %c0_i32_0 = arith.constant 0 : i32
    %c0_i32_1 = arith.constant 0 : i32
    return %c0_i32, %c0_i32_0 : i32, i32
  }
  func.func @transform_3(%arg0: i32, %arg1: i32) -> (i32, i32) {
    %c0_i32 = arith.constant 0 : i32
    %c0_i32_0 = arith.constant 0 : i32
    return %arg0, %c0_i32 : i32, i32
  }
  func.func @transform_4(%arg0: i32, %arg1: i32) -> (i32, i32, i32) {
    %c0_i32 = arith.constant 0 : i32
    %c0_i32_0 = arith.constant 0 : i32
    %c0_i32_1 = arith.constant 0 : i32
    return %arg0, %c0_i32, %c0_i32_0 : i32, i32, i32
  }
}

</mosaic_0001>

<llo_original>
// kernel: tpu_custom_call.1
$region0: #{tpu_custom_call.1}
  #allocation0 [shape = 'u32[]', space=smem, size = 0x4, offset = 0x4, fixed_abs, tag = 'smem constant byte address 0x4 - core index']
  #allocation1 [shape = 'u32[144,128]{1,0:T(1,128)}', space=vmem, size = 0x12000, scoped, tag = 'internal scratch']
  #allocation2 [shape = 'f32[128,128]{1,0:T(8,128)}', space=vmem, size = 0x10000, scoped, tag = 'scratch operand']
  %s0 = inlined_call_operand.hbm [shape: bf16[128,128], index: 0, kind: input, shape index: {}]
  %s1 = inlined_call_operand.hbm [shape: bf16[128,128], index: 1, kind: input, shape index: {}]
  %s2 = inlined_call_operand.vmem [shape: f32[1,128], index: 2, kind: input, shape index: {}]
  %s3 = inlined_call_operand.hbm [shape: bf16[128,128], index: 3, kind: output, shape index: {0}]
  %s4 = inlined_call_operand.hbm [shape: f32[1,8,128], index: 4, kind: output, shape index: {1}]
  %5 = xla_tuple %s3, %s4
  %s6 = sld [smem:[#allocation0]]
  $region46: #{tpu_custom_call.1} parent=0
    _
  %s8 = ssub.s32 1, %s6
  %s9 = scalar_select 0, %s8, %s6
  $region1: #{tpu_custom_call.1} parent=0
    #allocation3 [shape = 'u8[32768]{0}', space=vmem, size = 0x8000, scoped, tag = 'input window, operand 0, single buffered']
    #allocation4 [shape = 's32[1]{0}', space=sflag, size = 0x4, scoped, tag = 'scoped memory for tpu_custom_call.1']
    #allocation5 [shape = 's32[1]{0}', space=sflag, size = 0x4, scoped, tag = 'scoped memory for tpu_custom_call.1']
    #allocation6 [shape = 'u8[32768]{0}', space=vmem, size = 0x8000, scoped, tag = 'input window, operand 1, single buffered']
    #allocation7 [shape = 's32[1]{0}', space=sflag, size = 0x4, scoped, tag = 'scoped memory for tpu_custom_call.1']
    #allocation8 [shape = 'u8[32768]{0}', space=vmem, size = 0x8000, scoped, tag = 'output window, operand 0, single buffered']
    #allocation9 [shape = 'u8[4096]{0}', space=vmem, size = 0x1000, scoped, tag = 'output window, operand 1, single buffered']
    #allocation10 [shape = 's32[1]{0}', space=sflag, size = 0x4, scoped, tag = 'scoped memory for tpu_custom_call.1']
    %10 = vsyncpa [#allocation4], 0
    %11 = vsyncpa [#allocation7], 0
    %12 = vsyncpa [#allocation5], 0
    %13 = vsyncpa [#allocation10], 0
    // Predicated region
    $region2: #{tpu_custom_call.1} parent=1 // pred_check
      _
    $region3: #{tpu_custom_call.1} parent=1 // pred_check_branch
      %15 = sbr.rel (0) target = $region5
    $region4: #{tpu_custom_call.1} parent=1 // pred_region
      %s17 = ssub.s32 1024, 1024
      %18 = vsyncadd [#allocation4], %s17
      %s19 = sshll.u32 [#allocation3], 4
      %s20 = int_to_ptr.vmem [resolvable:$true] %s19
      %25 = dma.hbm_to_vmem [thread:$0]  %s0, 1024, %s20, [#allocation4], 64, 64, 4
    $region5: #{tpu_custom_call.1} parent=1 // pred_fallthru
      _
    // Predicated region
    $region6: #{tpu_custom_call.1} parent=1 // pred_check
      _
    $region7: #{tpu_custom_call.1} parent=1 // pred_check_branch
      %27 = sbr.rel (0) target = $region9
    $region8: #{tpu_custom_call.1} parent=1 // pred_region
      %s29 = ssub.s32 1024, 1024
      %30 = vsyncadd [#allocation7], %s29
      %s31 = sshll.u32 [#allocation6], 4
      %s32 = int_to_ptr.vmem [resolvable:$true] %s31
      %37 = dma.hbm_to_vmem [thread:$0]  %s1, 1024, %s32, [#allocation7], 64, 64, 4
    $region9: #{tpu_custom_call.1} parent=1 // pred_fallthru
      _
    // Predicated region
    $region10: #{tpu_custom_call.1} parent=1 // pred_check
      _
    $region11: #{tpu_custom_call.1} parent=1 // pred_check_branch
      %39 = sbr.rel (0) target = $region13
    $region12: #{tpu_custom_call.1} parent=1 // pred_region
      _
    $region13: #{tpu_custom_call.1} parent=1 // pred_fallthru
      _
    // Predicated region
    $region14: #{tpu_custom_call.1} parent=1 // pred_check
      _
    $region15: #{tpu_custom_call.1} parent=1 // pred_check_branch
      %41 = sbr.rel (0) target = $region17
    $region16: #{tpu_custom_call.1} parent=1 // pred_region
      %42 = dma.done [#allocation4], 1024
    $region17: #{tpu_custom_call.1} parent=1 // pred_fallthru
      _
    // Predicated region
    $region18: #{tpu_custom_call.1} parent=1 // pred_check
      _
    $region19: #{tpu_custom_call.1} parent=1 // pred_check_branch
      %44 = sbr.rel (0) target = $region21
    $region20: #{tpu_custom_call.1} parent=1 // pred_region
      %45 = dma.done [#allocation7], 1024
    $region21: #{tpu_custom_call.1} parent=1 // pred_fallthru
      _
    %s47 = smul.u32 0, 128
    %p48 = scmp.eq.s32.totalorder 0, 0
    // Predicated region
    $region22: #{tpu_custom_call.1} parent=1 // pred_check
      %p49 = pneg %p48
    $region23: #{tpu_custom_call.1} parent=1 // pred_check_branch
      %51 = sbr.rel (%p49) target = $region25
    $region24: #{tpu_custom_call.1} parent=1 // pred_region
      %52 = vst [vmem:[#allocation2] sm:$0xff] 0.0
      %53 = vst [vmem:[#allocation2 + $0x8] sm:$0xff] 0.0
      %54 = vst [vmem:[#allocation2 + $0x10] sm:$0xff] 0.0
      %55 = vst [vmem:[#allocation2 + $0x18] sm:$0xff] 0.0
      %56 = vst [vmem:[#allocation2 + $0x20] sm:$0xff] 0.0
      %57 = vst [vmem:[#allocation2 + $0x28] sm:$0xff] 0.0
      %58 = vst [vmem:[#allocation2 + $0x30] sm:$0xff] 0.0
      %59 = vst [vmem:[#allocation2 + $0x38] sm:$0xff] 0.0
      %60 = vst [vmem:[#allocation2 + $0x40] sm:$0xff] 0.0
      %61 = vst [vmem:[#allocation2 + $0x48] sm:$0xff] 0.0
      %62 = vst [vmem:[#allocation2 + $0x50] sm:$0xff] 0.0
      %63 = vst [vmem:[#allocation2 + $0x58] sm:$0xff] 0.0
      %64 = vst [vmem:[#allocation2 + $0x60] sm:$0xff] 0.0
      %65 = vst [vmem:[#allocation2 + $0x68] sm:$0xff] 0.0
      %66 = vst [vmem:[#allocation2 + $0x70] sm:$0xff] 0.0
      %67 = vst [vmem:[#allocation2 + $0x78] sm:$0xff] 0.0
    $region25: #{tpu_custom_call.1} parent=1 // pred_fallthru
      _
    %v68 = vld [vmem:[#allocation3] sm:$0xf]
    %v69 = vld [vmem:[#allocation3 + $0x4] sm:$0xf]
    %v70 = vld [vmem:[#allocation3 + $0x8] sm:$0xf]
    %v71 = vld [vmem:[#allocation3 + $0xc] sm:$0xf]
    %v72 = vld [vmem:[#allocation3 + $0x10] sm:$0xf]
    %v73 = vld [vmem:[#allocation3 + $0x14] sm:$0xf]
    %v74 = vld [vmem:[#allocation3 + $0x18] sm:$0xf]
    %v75 = vld [vmem:[#allocation3 + $0x1c] sm:$0xf]
    %v76 = vld [vmem:[#allocation3 + $0x20] sm:$0xf]
    %v77 = vld [vmem:[#allocation3 + $0x24] sm:$0xf]
    %v78 = vld [vmem:[#allocation3 + $0x28] sm:$0xf]
    %v79 = vld [vmem:[#allocation3 + $0x2c] sm:$0xf]
    %v80 = vld [vmem:[#allocation3 + $0x30] sm:$0xf]
    %v81 = vld [vmem:[#allocation3 + $0x34] sm:$0xf]
    %v82 = vld [vmem:[#allocation3 + $0x38] sm:$0xf]
    %v83 = vld [vmem:[#allocation3 + $0x3c] sm:$0xf]
    %v84 = vld [vmem:[#allocation2] sm:$0xff]
    %v85 = vld [vmem:[#allocation2 + $0x8] sm:$0xff]
    %v86 = vld [vmem:[#allocation2 + $0x10] sm:$0xff]
    %v87 = vld [vmem:[#allocation2 + $0x18] sm:$0xff]
    %v88 = vld [vmem:[#allocation2 + $0x20] sm:$0xff]
    %v89 = vld [vmem:[#allocation2 + $0x28] sm:$0xff]
    %v90 = vld [vmem:[#allocation2 + $0x30] sm:$0xff]
    %v91 = vld [vmem:[#allocation2 + $0x38] sm:$0xff]
    %v92 = vld [vmem:[#allocation2 + $0x40] sm:$0xff]
    %v93 = vld [vmem:[#allocation2 + $0x48] sm:$0xff]
    %v94 = vld [vmem:[#allocation2 + $0x50] sm:$0xff]
    %v95 = vld [vmem:[#allocation2 + $0x58] sm:$0xff]
    %v96 = vld [vmem:[#allocation2 + $0x60] sm:$0xff]
    %v97 = vld [vmem:[#allocation2 + $0x68] sm:$0xff]
    %v98 = vld [vmem:[#allocation2 + $0x70] sm:$0xff]
    %v99 = vld [vmem:[#allocation2 + $0x78] sm:$0xff]
    %v100 = vld [vmem:[#allocation6] sm:$0xf]
    %v101 = vld [vmem:[#allocation6 + $0x4] sm:$0xf]
    %v102 = vld [vmem:[#allocation6 + $0x8] sm:$0xf]
    %v103 = vld [vmem:[#allocation6 + $0xc] sm:$0xf]
    %v104 = vld [vmem:[#allocation6 + $0x10] sm:$0xf]
    %v105 = vld [vmem:[#allocation6 + $0x14] sm:$0xf]
    %v106 = vld [vmem:[#allocation6 + $0x18] sm:$0xf]
    %v107 = vld [vmem:[#allocation6 + $0x1c] sm:$0xf]
    %v108 = vld [vmem:[#allocation6 + $0x20] sm:$0xf]
    %v109 = vld [vmem:[#allocation6 + $0x24] sm:$0xf]
    %v110 = vld [vmem:[#allocation6 + $0x28] sm:$0xf]
    %v111 = vld [vmem:[#allocation6 + $0x2c] sm:$0xf]
    %v112 = vld [vmem:[#allocation6 + $0x30] sm:$0xf]
    %v113 = vld [vmem:[#allocation6 + $0x34] sm:$0xf]
    %v114 = vld [vmem:[#allocation6 + $0x38] sm:$0xf]
    %v115 = vld [vmem:[#allocation6 + $0x3c] sm:$0xf]
    %v132 = vunpack.c.l.b16 %v68
    %v133 = vunpack.c.l.b16 %v69
    %v134 = vunpack.c.l.b16 %v70
    %v135 = vunpack.c.l.b16 %v71
    %v136 = vunpack.c.l.b16 %v72
    %v137 = vunpack.c.l.b16 %v73
    %v138 = vunpack.c.l.b16 %v74
    %v139 = vunpack.c.l.b16 %v75
    %v140 = vunpack.c.l.b16 %v76
    %v141 = vunpack.c.l.b16 %v77
    %v142 = vunpack.c.l.b16 %v78
    %v143 = vunpack.c.l.b16 %v79
    %v144 = vunpack.c.l.b16 %v80
    %v145 = vunpack.c.l.b16 %v81
    %v146 = vunpack.c.l.b16 %v82
    %v147 = vunpack.c.l.b16 %v83
    %v148 = vpack.c.b16 %v133, %v132
    %v149 = vpack.c.b16 %v135, %v134
    %v150 = vpack.c.b16 %v137, %v136
    %v151 = vpack.c.b16 %v139, %v138
    %v152 = vpack.c.b16 %v141, %v140
    %v153 = vpack.c.b16 %v143, %v142
    %v154 = vpack.c.b16 %v145, %v144
    %v155 = vpack.c.b16 %v147, %v146
    %v180 = vunpack.c.l.b16 %v100
    %v181 = vunpack.c.l.b16 %v101
    %v182 = vunpack.c.l.b16 %v102
    %v183 = vunpack.c.l.b16 %v103
    %v184 = vunpack.c.l.b16 %v104
    %v185 = vunpack.c.l.b16 %v105
    %v186 = vunpack.c.l.b16 %v106
    %v187 = vunpack.c.l.b16 %v107
    %v188 = vunpack.c.l.b16 %v108
    %v189 = vunpack.c.l.b16 %v109
    %v190 = vunpack.c.l.b16 %v110
    %v191 = vunpack.c.l.b16 %v111
    %v192 = vunpack.c.l.b16 %v112
    %v193 = vunpack.c.l.b16 %v113
    %v194 = vunpack.c.l.b16 %v114
    %v195 = vunpack.c.l.b16 %v115
    %v196 = vpack.c.b16 %v181, %v180
    %v197 = vpack.c.b16 %v183, %v182
    %v198 = vpack.c.b16 %v185, %v184
    %v199 = vpack.c.b16 %v187, %v186
    %v200 = vpack.c.b16 %v189, %v188
    %v201 = vpack.c.b16 %v191, %v190
    %v202 = vpack.c.b16 %v193, %v192
    %v203 = vpack.c.b16 %v195, %v194
    %212 = vmatprep.subr.bf16.mxu0 0
    %213 = vmatpush1.bf16.msra.mxu0 %v203
    %214 = vmatprep.subr.bf16.mxu0 0
    %215 = vmatpush1.bf16.msra.mxu0 %v202
    %216 = vmatprep.subr.bf16.mxu0 0
    %217 = vmatpush1.bf16.msra.mxu0 %v201
    %218 = vmatprep.subr.bf16.mxu0 0
    %219 = vmatpush1.bf16.msra.mxu0 %v200
    %220 = vmatprep.subr.bf16.mxu0 0
    %221 = vmatpush1.bf16.msra.mxu0 %v199
    %222 = vmatprep.subr.bf16.mxu0 0
    %223 = vmatpush1.bf16.msra.mxu0 %v198
    %224 = vmatprep.subr.bf16.mxu0 0
    %225 = vmatpush1.bf16.msra.mxu0 %v197
    %226 = vmatprep.subr.bf16.mxu0 0
    %227 = vmatpush1.bf16.msra.mxu0 %v196
    %228 = vmatprep.subr.bf16.mxu0 0
    %229 = vmatpush2.bf16.msra.mxu0 0
    %230 = vmatprep.subr.bf16.mxu0 0
    %231 = vmatpush2.bf16.msra.mxu0 0
    %232 = vmatprep.subr.bf16.mxu0 0
    %233 = vmatpush2.bf16.msra.mxu0 0
    %234 = vmatprep.subr.bf16.mxu0 0
    %235 = vmatpush2.bf16.msra.mxu0 0
    %236 = vmatprep.subr.bf16.mxu0 0
    %237 = vmatpush2.bf16.msra.mxu0 0
    %238 = vmatprep.subr.bf16.mxu0 0
    %239 = vmatpush2.bf16.msra.mxu0 0
    %240 = vmatprep.subr.bf16.mxu0 0
    %241 = vmatpush2.bf16.msra.mxu0 0
    %242 = vmatprep.subr.bf16.mxu0 0
    %243 = vmatpush2.bf16.msra.mxu0 0
    %244 = vmatprep.mubr.bf16.mxu0 0
    %245 = vmatmul.mubr.bf16.gmra.mxu0 %v148
    %v246 = vpop.f32.mrf.mxu0
    %v247 = vadd.f32 0.0, %v246
    %v248 = vpop.f32.mrf.mxu0
    %v249 = vpop.f32.mrf.mxu0
    %v250 = vadd.f32 0.0, %v249
    %v251 = vpop.f32.mrf.mxu0
    %252 = vmatprep.mubr.bf16.mxu0 0
    %253 = vmatmul.mubr.bf16.gmra.mxu0 %v149
    %v254 = vpop.f32.mrf.mxu0
    %v255 = vadd.f32 0.0, %v254
    %v256 = vpop.f32.mrf.mxu0
    %v257 = vpop.f32.mrf.mxu0
    %v258 = vadd.f32 0.0, %v257
    %v259 = vpop.f32.mrf.mxu0
    %260 = vmatprep.mubr.bf16.mxu0 0
    %261 = vmatmul.mubr.bf16.gmra.mxu0 %v150
    %v262 = vpop.f32.mrf.mxu0
    %v263 = vadd.f32 0.0, %v262
    %v264 = vpop.f32.mrf.mxu0
    %v265 = vpop.f32.mrf.mxu0
    %v266 = vadd.f32 0.0, %v265
    %v267 = vpop.f32.mrf.mxu0
    %268 = vmatprep.mubr.bf16.mxu0 0
    %269 = vmatmul.mubr.bf16.gmra.mxu0 %v151
    %v270 = vpop.f32.mrf.mxu0
    %v271 = vadd.f32 0.0, %v270
    %v272 = vpop.f32.mrf.mxu0
    %v273 = vpop.f32.mrf.mxu0
    %v274 = vadd.f32 0.0, %v273
    %v275 = vpop.f32.mrf.mxu0
    %276 = vmatprep.mubr.bf16.mxu0 0
    %277 = vmatmul.mubr.bf16.gmra.mxu0 %v152
    %v278 = vpop.f32.mrf.mxu0
    %v279 = vadd.f32 0.0, %v278
    %v280 = vpop.f32.mrf.mxu0
    %v281 = vpop.f32.mrf.mxu0
    %v282 = vadd.f32 0.0, %v281
    %v283 = vpop.f32.mrf.mxu0
    %284 = vmatprep.mubr.bf16.mxu0 0
    %285 = vmatmul.mubr.bf16.gmra.mxu0 %v153
    %v286 = vpop.f32.mrf.mxu0
    %v287 = vadd.f32 0.0, %v286
    %v288 = vpop.f32.mrf.mxu0
    %v289 = vpop.f32.mrf.mxu0
    %v290 = vadd.f32 0.0, %v289
    %v291 = vpop.f32.mrf.mxu0
    %292 = vmatprep.mubr.bf16.mxu0 0
    %293 = vmatmul.mubr.bf16.gmra.mxu0 %v154
    %v294 = vpop.f32.mrf.mxu0
    %v295 = vadd.f32 0.0, %v294
    %v296 = vpop.f32.mrf.mxu0
    %v297 = vpop.f32.mrf.mxu0
    %v298 = vadd.f32 0.0, %v297
    %v299 = vpop.f32.mrf.mxu0
    %300 = vmatprep.mubr.bf16.mxu0 0
    %301 = vmatmul.mubr.bf16.gmra.mxu0 %v155
    %v302 = vpop.f32.mrf.mxu0
    %v303 = vadd.f32 0.0, %v302
    %v304 = vpop.f32.mrf.mxu0
    %v305 = vpop.f32.mrf.mxu0
    %v306 = vadd.f32 0.0, %v305
    %v307 = vpop.f32.mrf.mxu0
    %308 = vdwg.mxu0
    %v309 = vadd.f32 %v84, %v247
    %v310 = vadd.f32 %v85, %v250
    %v311 = vadd.f32 %v86, %v255
    %v312 = vadd.f32 %v87, %v258
    %v313 = vadd.f32 %v88, %v263
    %v314 = vadd.f32 %v89, %v266
    %v315 = vadd.f32 %v90, %v271
    %v316 = vadd.f32 %v91, %v274
    %v317 = vadd.f32 %v92, %v279
    %v318 = vadd.f32 %v93, %v282
    %v319 = vadd.f32 %v94, %v287
    %v320 = vadd.f32 %v95, %v290
    %v321 = vadd.f32 %v96, %v295
    %v322 = vadd.f32 %v97, %v298
    %v323 = vadd.f32 %v98, %v303
    %v324 = vadd.f32 %v99, %v306
    %325 = vst [vmem:[#allocation2] sm:$0xff] %v309
    %326 = vst [vmem:[#allocation2 + $0x8] sm:$0xff] %v310
    %327 = vst [vmem:[#allocation2 + $0x10] sm:$0xff] %v311
    %328 = vst [vmem:[#allocation2 + $0x18] sm:$0xff] %v312
    %329 = vst [vmem:[#allocation2 + $0x20] sm:$0xff] %v313
    %330 = vst [vmem:[#allocation2 + $0x28] sm:$0xff] %v314
    %331 = vst [vmem:[#allocation2 + $0x30] sm:$0xff] %v315
    %332 = vst [vmem:[#allocation2 + $0x38] sm:$0xff] %v316
    %333 = vst [vmem:[#allocation2 + $0x40] sm:$0xff] %v317
    %334 = vst [vmem:[#allocation2 + $0x48] sm:$0xff] %v318
    %335 = vst [vmem:[#allocation2 + $0x50] sm:$0xff] %v319
    %336 = vst [vmem:[#allocation2 + $0x58] sm:$0xff] %v320
    %337 = vst [vmem:[#allocation2 + $0x60] sm:$0xff] %v321
    %338 = vst [vmem:[#allocation2 + $0x68] sm:$0xff] %v322
    %339 = vst [vmem:[#allocation2 + $0x70] sm:$0xff] %v323
    %340 = vst [vmem:[#allocation2 + $0x78] sm:$0xff] %v324
    // Predicated region
    $region26: #{tpu_custom_call.1} parent=1 // pred_check
      %p341 = pneg %p48
    $region27: #{tpu_custom_call.1} parent=1 // pred_check_branch
      %343 = sbr.rel (%p341) target = $region29
    $region28: #{tpu_custom_call.1} parent=1 // pred_region
      %v344 = vld [vmem:[#allocation2] sm:$0xff]
      %v345 = vld [vmem:[#allocation2 + $0x8] sm:$0xff]
      %v346 = vld [vmem:[#allocation2 + $0x10] sm:$0xff]
      %v347 = vld [vmem:[#allocation2 + $0x18] sm:$0xff]
      %v348 = vld [vmem:[#allocation2 + $0x20] sm:$0xff]
      %v349 = vld [vmem:[#allocation2 + $0x28] sm:$0xff]
      %v350 = vld [vmem:[#allocation2 + $0x30] sm:$0xff]
      %v351 = vld [vmem:[#allocation2 + $0x38] sm:$0xff]
      %v352 = vld [vmem:[#allocation2 + $0x40] sm:$0xff]
      %v353 = vld [vmem:[#allocation2 + $0x48] sm:$0xff]
      %v354 = vld [vmem:[#allocation2 + $0x50] sm:$0xff]
      %v355 = vld [vmem:[#allocation2 + $0x58] sm:$0xff]
      %v356 = vld [vmem:[#allocation2 + $0x60] sm:$0xff]
      %v357 = vld [vmem:[#allocation2 + $0x68] sm:$0xff]
      %v358 = vld [vmem:[#allocation2 + $0x70] sm:$0xff]
      %v359 = vld [vmem:[#allocation2 + $0x78] sm:$0xff]
      %v360 = vld [vmem:[%s2] sm:$0x1]
      %v362 = vlaneseq
      %v363 = vshrl.u32 %v362, 7
      %v364 = vsub.s32 0, %v363
      %v365 = vrot.slane %v360, %v364
      %v367 = vadd.f32 %v344, %v365
      %v368 = vadd.f32 %v345, %v365
      %v369 = vadd.f32 %v346, %v365
      %v370 = vadd.f32 %v347, %v365
      %v371 = vadd.f32 %v348, %v365
      %v372 = vadd.f32 %v349, %v365
      %v373 = vadd.f32 %v350, %v365
      %v374 = vadd.f32 %v351, %v365
      %v375 = vadd.f32 %v352, %v365
      %v376 = vadd.f32 %v353, %v365
      %v377 = vadd.f32 %v354, %v365
      %v378 = vadd.f32 %v355, %v365
      %v379 = vadd.f32 %v356, %v365
      %v380 = vadd.f32 %v357, %v365
      %v381 = vadd.f32 %v358, %v365
      %v382 = vadd.f32 %v359, %v365
      %v383 = vpack.c.bf16 %v368, %v367
      %v384 = vpack.c.bf16 %v370, %v369
      %v385 = vpack.c.bf16 %v372, %v371
      %v386 = vpack.c.bf16 %v374, %v373
      %v387 = vpack.c.bf16 %v376, %v375
      %v388 = vpack.c.bf16 %v378, %v377
      %v389 = vpack.c.bf16 %v380, %v379
      %v390 = vpack.c.bf16 %v382, %v381
      %v399 = vunpack.c.l.b16 %v383
      %v400 = vunpack.c.h.b16 %v383
      %v401 = vunpack.c.l.b16 %v384
      %v402 = vunpack.c.h.b16 %v384
      %v403 = vunpack.c.l.b16 %v385
      %v404 = vunpack.c.h.b16 %v385
      %v405 = vunpack.c.l.b16 %v386
      %v406 = vunpack.c.h.b16 %v386
      %v407 = vunpack.c.l.b16 %v387
      %v408 = vunpack.c.h.b16 %v387
      %v409 = vunpack.c.l.b16 %v388
      %v410 = vunpack.c.h.b16 %v388
      %v411 = vunpack.c.l.b16 %v389
      %v412 = vunpack.c.h.b16 %v389
      %v413 = vunpack.c.l.b16 %v390
      %v414 = vunpack.c.h.b16 %v390
      %v415 = vpack.c.b16 %v399, %v399
      %v416 = vpack.c.b16 %v400, %v400
      %v417 = vpack.c.b16 %v401, %v401
      %v418 = vpack.c.b16 %v402, %v402
      %v419 = vpack.c.b16 %v403, %v403
      %v420 = vpack.c.b16 %v404, %v404
      %v421 = vpack.c.b16 %v405, %v405
      %v422 = vpack.c.b16 %v406, %v406
      %v423 = vpack.c.b16 %v407, %v407
      %v424 = vpack.c.b16 %v408, %v408
      %v425 = vpack.c.b16 %v409, %v409
      %v426 = vpack.c.b16 %v410, %v410
      %v427 = vpack.c.b16 %v411, %v411
      %v428 = vpack.c.b16 %v412, %v412
      %v429 = vpack.c.b16 %v413, %v413
      %v430 = vpack.c.b16 %v414, %v414
      %447 = vst [vmem:[#allocation8] sm:$0xf] %v415
      %448 = vst [vmem:[#allocation8 + $0x4] sm:$0xf] %v416
      %449 = vst [vmem:[#allocation8 + $0x8] sm:$0xf] %v417
      %450 = vst [vmem:[#allocation8 + $0xc] sm:$0xf] %v418
      %451 = vst [vmem:[#allocation8 + $0x10] sm:$0xf] %v419
      %452 = vst [vmem:[#allocation8 + $0x14] sm:$0xf] %v420
      %453 = vst [vmem:[#allocation8 + $0x18] sm:$0xf] %v421
      %454 = vst [vmem:[#allocation8 + $0x1c] sm:$0xf] %v422
      %455 = vst [vmem:[#allocation8 + $0x20] sm:$0xf] %v423
      %456 = vst [vmem:[#allocation8 + $0x24] sm:$0xf] %v424
      %457 = vst [vmem:[#allocation8 + $0x28] sm:$0xf] %v425
      %458 = vst [vmem:[#allocation8 + $0x2c] sm:$0xf] %v426
      %459 = vst [vmem:[#allocation8 + $0x30] sm:$0xf] %v427
      %460 = vst [vmem:[#allocation8 + $0x34] sm:$0xf] %v428
      %461 = vst [vmem:[#allocation8 + $0x38] sm:$0xf] %v429
      %462 = vst [vmem:[#allocation8 + $0x3c] sm:$0xf] %v430
      %v463 = vlaneseq
      %v464 = vshrl.u32 %v463, 7
      %v465 = vadd.s32 %v464, 8
      %v466 = vadd.s32 %v464, 16
      %v467 = vadd.s32 %v464, 24
      %v468 = vadd.s32 %v464, 32
      %v469 = vadd.s32 %v464, 40
      %v470 = vadd.s32 %v464, 48
      %v471 = vadd.s32 %v464, 56
      %v472 = vadd.s32 %v464, 64
      %v473 = vadd.s32 %v464, 72
      %v474 = vadd.s32 %v464, 80
      %v475 = vadd.s32 %v464, 88
      %v476 = vadd.s32 %v464, 96
      %v477 = vadd.s32 %v464, 104
      %v478 = vadd.s32 %v464, 112
      %v479 = vadd.s32 %v464, 120
      %v480 = vstv %s47
      %v481 = vadd.s32 %v480, %v464
      %v482 = vadd.s32 %v480, %v465
      %v483 = vadd.s32 %v480, %v466
      %v484 = vadd.s32 %v480, %v467
      %v485 = vadd.s32 %v480, %v468
      %v486 = vadd.s32 %v480, %v469
      %v487 = vadd.s32 %v480, %v470
      %v488 = vadd.s32 %v480, %v471
      %v489 = vadd.s32 %v480, %v472
      %v490 = vadd.s32 %v480, %v473
      %v491 = vadd.s32 %v480, %v474
      %v492 = vadd.s32 %v480, %v475
      %v493 = vadd.s32 %v480, %v476
      %v494 = vadd.s32 %v480, %v477
      %v495 = vadd.s32 %v480, %v478
      %v496 = vadd.s32 %v480, %v479
      %vm497 = vcmp.lt.s32.totalorder %v481, 128
      %vm498 = vcmp.lt.s32.totalorder %v482, 128
      %vm499 = vcmp.lt.s32.totalorder %v483, 128
      %vm500 = vcmp.lt.s32.totalorder %v484, 128
      %vm501 = vcmp.lt.s32.totalorder %v485, 128
      %vm502 = vcmp.lt.s32.totalorder %v486, 128
      %vm503 = vcmp.lt.s32.totalorder %v487, 128
      %vm504 = vcmp.lt.s32.totalorder %v488, 128
      %vm505 = vcmp.lt.s32.totalorder %v489, 128
      %vm506 = vcmp.lt.s32.totalorder %v490, 128
      %vm507 = vcmp.lt.s32.totalorder %v491, 128
      %vm508 = vcmp.lt.s32.totalorder %v492, 128
      %vm509 = vcmp.lt.s32.totalorder %v493, 128
      %vm510 = vcmp.lt.s32.totalorder %v494, 128
      %vm511 = vcmp.lt.s32.totalorder %v495, 128
      %vm512 = vcmp.lt.s32.totalorder %v496, 128
      %v513 = vsel %vm497, 1, 0
      %v514 = vsel %vm498, 1, 0
      %v515 = vsel %vm499, 1, 0
      %v516 = vsel %vm500, 1, 0
      %v517 = vsel %vm501, 1, 0
      %v518 = vsel %vm502, 1, 0
      %v519 = vsel %vm503, 1, 0
      %v520 = vsel %vm504, 1, 0
      %v521 = vsel %vm505, 1, 0
      %v522 = vsel %vm506, 1, 0
      %v523 = vsel %vm507, 1, 0
      %v524 = vsel %vm508, 1, 0
      %v525 = vsel %vm509, 1, 0
      %v526 = vsel %vm510, 1, 0
      %v527 = vsel %vm511, 1, 0
      %v528 = vsel %vm512, 1, 0
      %vm529 = vcmp.eq.s32.totalorder %v513, 1
      %vm530 = vcmp.eq.s32.totalorder %v514, 1
      %vm531 = vcmp.eq.s32.totalorder %v515, 1
      %vm532 = vcmp.eq.s32.totalorder %v516, 1
      %vm533 = vcmp.eq.s32.totalorder %v517, 1
      %vm534 = vcmp.eq.s32.totalorder %v518, 1
      %vm535 = vcmp.eq.s32.totalorder %v519, 1
      %vm536 = vcmp.eq.s32.totalorder %v520, 1
      %vm537 = vcmp.eq.s32.totalorder %v521, 1
      %vm538 = vcmp.eq.s32.totalorder %v522, 1
      %vm539 = vcmp.eq.s32.totalorder %v523, 1
      %vm540 = vcmp.eq.s32.totalorder %v524, 1
      %vm541 = vcmp.eq.s32.totalorder %v525, 1
      %vm542 = vcmp.eq.s32.totalorder %v526, 1
      %vm543 = vcmp.eq.s32.totalorder %v527, 1
      %vm544 = vcmp.eq.s32.totalorder %v528, 1
      %v545 = vsel %vm529, %v367, 0.0
      %v546 = vsel %vm530, %v368, 0.0
      %v547 = vsel %vm531, %v369, 0.0
      %v548 = vsel %vm532, %v370, 0.0
      %v549 = vsel %vm533, %v371, 0.0
      %v550 = vsel %vm534, %v372, 0.0
      %v551 = vsel %vm535, %v373, 0.0
      %v552 = vsel %vm536, %v374, 0.0
      %v553 = vsel %vm537, %v375, 0.0
      %v554 = vsel %vm538, %v376, 0.0
      %v555 = vsel %vm539, %v377, 0.0
      %v556 = vsel %vm540, %v378, 0.0
      %v557 = vsel %vm541, %v379, 0.0
      %v558 = vsel %vm542, %v380, 0.0
      %v559 = vsel %vm543, %v381, 0.0
      %v560 = vsel %vm544, %v382, 0.0
      %v561 = vadd.f32 %v545, %v546
      %v562 = vadd.f32 %v561, %v547
      %v563 = vadd.f32 %v562, %v548
      %v564 = vadd.f32 %v563, %v549
      %v565 = vadd.f32 %v564, %v550
      %v566 = vadd.f32 %v565, %v551
      %v567 = vadd.f32 %v566, %v552
      %v568 = vadd.f32 %v567, %v553
      %v569 = vadd.f32 %v568, %v554
      %v570 = vadd.f32 %v569, %v555
      %v571 = vadd.f32 %v570, %v556
      %v572 = vadd.f32 %v571, %v557
      %v573 = vadd.f32 %v572, %v558
      %v574 = vadd.f32 %v573, %v559
      %v575 = vadd.f32 %v574, %v560
      %v576 = vrot.slane %v575, 4
      %v577 = vadd.f32 %v575, %v576
      %v578 = vrot.slane %v577, 2
      %v579 = vadd.f32 %v577, %v578
      %v580 = vrot.slane %v579, 1
      %v581 = vadd.f32 %v579, %v580
      %v582 = vmul.f32 %v545, %v545
      %v583 = vmul.f32 %v546, %v546
      %v584 = vmul.f32 %v547, %v547
      %v585 = vmul.f32 %v548, %v548
      %v586 = vmul.f32 %v549, %v549
      %v587 = vmul.f32 %v550, %v550
      %v588 = vmul.f32 %v551, %v551
      %v589 = vmul.f32 %v552, %v552
      %v590 = vmul.f32 %v553, %v553
      %v591 = vmul.f32 %v554, %v554
      %v592 = vmul.f32 %v555, %v555
      %v593 = vmul.f32 %v556, %v556
      %v594 = vmul.f32 %v557, %v557
      %v595 = vmul.f32 %v558, %v558
      %v596 = vmul.f32 %v559, %v559
      %v597 = vmul.f32 %v560, %v560
      %v598 = vadd.f32 %v582, %v583
      %v599 = vadd.f32 %v598, %v584
      %v600 = vadd.f32 %v599, %v585
      %v601 = vadd.f32 %v600, %v586
      %v602 = vadd.f32 %v601, %v587
      %v603 = vadd.f32 %v602, %v588
      %v604 = vadd.f32 %v603, %v589
      %v605 = vadd.f32 %v604, %v590
      %v606 = vadd.f32 %v605, %v591
      %v607 = vadd.f32 %v606, %v592
      %v608 = vadd.f32 %v607, %v593
      %v609 = vadd.f32 %v608, %v594
      %v610 = vadd.f32 %v609, %v595
      %v611 = vadd.f32 %v610, %v596
      %v612 = vadd.f32 %v611, %v597
      %v613 = vrot.slane %v612, 4
      %v614 = vadd.f32 %v612, %v613
      %v615 = vrot.slane %v614, 2
      %v616 = vadd.f32 %v614, %v615
      %v617 = vrot.slane %v616, 1
      %v618 = vadd.f32 %v616, %v617
      %vm619 = vcmask 1040384
      %v620 = vsel %vm619, %v581, %v618
      %vm621 = vcmask 1041408
      %v622 = vsel %vm621, %v620, 0.0
      %623 = vst [vmem:[#allocation9] sm:$0xff] %v622
    $region29: #{tpu_custom_call.1} parent=1 // pred_fallthru
      _
    // Predicated region
    $region30: #{tpu_custom_call.1} parent=1 // pred_check
      _
    $region31: #{tpu_custom_call.1} parent=1 // pred_check_branch
      %625 = sbr.rel (0) target = $region33
    $region32: #{tpu_custom_call.1} parent=1 // pred_region
      %s627 = ssub.s32 1024, 1024
      %628 = vsyncadd [#allocation5], %s627
      %s629 = sshll.u32 [#allocation8], 4
      %s630 = int_to_ptr.vmem [resolvable:$true] %s629
      %635 = dma.vmem_to_hbm [thread:$0]  %s630, 1024, %s3, [#allocation5], 64, 64, 4
    $region33: #{tpu_custom_call.1} parent=1 // pred_fallthru
      _
    // Predicated region
    $region34: #{tpu_custom_call.1} parent=1 // pred_check
      _
    $region35: #{tpu_custom_call.1} parent=1 // pred_check_branch
      %637 = sbr.rel (0) target = $region37
    $region36: #{tpu_custom_call.1} parent=1 // pred_region
      %s639 = ssub.s32 128, 128
      %640 = vsyncadd [#allocation10], %s639
      %s642 = sshll.u32 [#allocation9], 4
      %s643 = int_to_ptr.vmem [resolvable:$true] %s642
      %645 = dma.vmem_to_hbm [thread:$0]  %s643, 128, %s4, [#allocation10]
    $region37: #{tpu_custom_call.1} parent=1 // pred_fallthru
      _
    // Predicated region
    $region38: #{tpu_custom_call.1} parent=1 // pred_check
      _
    $region39: #{tpu_custom_call.1} parent=1 // pred_check_branch
      %647 = sbr.rel (0) target = $region41
    $region40: #{tpu_custom_call.1} parent=1 // pred_region
      %648 = dma.done [#allocation5], 1024
    $region41: #{tpu_custom_call.1} parent=1 // pred_fallthru
      _
    // Predicated region
    $region42: #{tpu_custom_call.1} parent=1 // pred_check
      _
    $region43: #{tpu_custom_call.1} parent=1 // pred_check_branch
      %650 = sbr.rel (0) target = $region45
    $region44: #{tpu_custom_call.1} parent=1 // pred_region
      %651 = dma.done [#allocation10], 128
    $region45: #{tpu_custom_call.1} parent=1 // pred_fallthru
      _
    %652 = vsyncpa [#allocation4], 1
    %653 = vsyncpa [#allocation7], 1
    %654 = vsyncpa [#allocation5], 1
    %655 = vsyncpa [#allocation10], 1

</llo_original>
